<compile_context>
chip_gen: v7x
topology: tpu7x:2x2x1
jax: 0.10.0
libtpu: 0.0.40
codegen_flags: <defaults>
</compile_context>

<pallas_src>
import math

import jax
import jax.numpy as jnp
from jax import lax
from jax.experimental import pallas as pl
from jax.experimental.pallas import tpu as pltpu


def _round_up(n, m):
    return ((n + m - 1) // m) * m


def _learned_sinusoidal_kernel(x_ref, w_ref, o_ref):
    """One batch tile.

    x_ref: (TB, 1)       f32  -- timesteps for this tile
    w_ref: (1, 1 + 2H)   f32  -- [0 | weights | weights] (layout-duplicated)
    o_ref: (TB, 1 + 2H)       -- output rows [x | sin | cos]
    """
    x = x_ref[...]                                   # (TB, 1)
    wf = w_ref[...]                                  # (1, 1 + 2H)
    h = (wf.shape[1] - 1) // 2

    # Outer product via VPU broadcast; keep off the MXU (K=1 matmul wastes it).
    # Keep freqs in f32: sin/cos arguments can be large in radians.
    freqs = x * (wf * (2.0 * math.pi))               # (TB, 1 + 2H) f32

    # Assemble the full row [x | sin | cos] in registers and issue a single
    # full-width store per tile (no shifted/masked sub-view stores).
    col = lax.broadcasted_iota(jnp.int32, freqs.shape, 1)
    sincos = jnp.where(col <= h, jnp.sin(freqs), jnp.cos(freqs))
    out = jnp.where(col == 0, x, sincos)
    o_ref[...] = out.astype(o_ref.dtype)


def learned_sinusoidal_pos_emb(x, weights, *, out_dtype=jnp.float32,
                               vmem_io_budget_bytes=8 * 1024 * 1024):
    """x: (B,) float; weights: (half_dim,) float.

    Returns (B, 1 + 2*half_dim), identical to the PyTorch forward
    (column order [x | sin | cos]). Set out_dtype=jnp.bfloat16 to halve HBM
    writeback if the downstream consumer accepts bf16 (compute stays f32).
    """
    assert x.ndim == 1
    assert weights.ndim == 1
    b = x.shape[0]
    half_dim = weights.shape[0]
    out_dim = 1 + 2 * half_dim
    out_dtype = jnp.dtype(out_dtype)

    # f32 compute regardless of input dtype.
    x2d = x.reshape(b, 1).astype(jnp.float32)
    # Layout plumbing (not math pre-scaling): duplicate the weights so the
    # kernel can compute sin/cos on the full row tile and do one dense store.
    w = weights.reshape(1, half_dim).astype(jnp.float32)
    w_full = jnp.concatenate(
        [jnp.zeros((1, 1), jnp.float32), w, w], axis=1)        # (1, 1 + 2H)

    # --- Batch tile selection -------------------------------------------
    # Rows aligned to 8 sublanes (16 for bf16 output, packed row pairs).
    row_align = 16 if out_dtype == jnp.dtype(jnp.bfloat16) else 8
    b_al = _round_up(b, row_align)

    # VMEM footprint per row, lane-padded to 128 and double-buffered.
    lane = 128
    x_row_bytes = lane * 4
    out_row_bytes = _round_up(out_dim, lane) * out_dtype.itemsize
    io_row_bytes = 2 * (x_row_bytes + out_row_bytes)
    tb_budget = max(row_align,
                    (vmem_io_budget_bytes // io_row_bytes) // row_align * row_align)
    tb = min(b_al, tb_budget)
    # Keep >= 2 grid steps when the batch is big enough so the "parallel"
    # batch axis can be split across v7x's two TensorCores.
    if b_al >= 2 * row_align:
        tb = min(tb, _round_up(-(-b_al // 2), row_align))
    tb = max(row_align, (tb // row_align) * row_align)

    b_pad = _round_up(b_al, tb)
    if b_pad != b:
        x2d = jnp.pad(x2d, ((0, b_pad - b), (0, 0)))

    grid = (b_pad // tb,)

    cost = pl.CostEstimate(
        flops=4 * b_pad * out_dim,                       # broadcast muls + selects
        transcendentals=2 * b_pad * out_dim,             # sin + cos over the tile
        bytes_accessed=(b_pad * 4 + out_dim * 4
                        + b_pad * out_dim * out_dtype.itemsize),
    )

    out = pl.pallas_call(
        _learned_sinusoidal_kernel,
        out_shape=jax.ShapeDtypeStruct((b_pad, out_dim), out_dtype),
        grid=grid,
        in_specs=[
            pl.BlockSpec((tb, 1), lambda i: (i, 0)),          # batch tile of x
            pl.BlockSpec((1, out_dim), lambda i: (0, 0)),     # full [0|w|w]
        ],
        out_specs=pl.BlockSpec((tb, out_dim), lambda i: (i, 0)),
        compiler_params=pltpu.CompilerParams(
            # Batch tiles are independent -> shard across v7x's 2 TensorCores.
            dimension_semantics=("parallel",),
            vmem_limit_bytes=32 * 1024 * 1024,
        ),
        cost_estimate=cost,
    )(x2d, w_full)

    if b_pad != b:
        out = out[:b]
    return out


def _reference(x, weights):
    freqs = x[:, None] * weights[None, :] * 2.0 * math.pi
    return jnp.concatenate([x[:, None], jnp.sin(freqs), jnp.cos(freqs)], axis=-1)


if __name__ == "__main__":
    key = jax.random.PRNGKey(0)
    k_w, k_x, k_x2, k_x3 = jax.random.split(key, 4)

    dim = 32                      # must be even
    half_dim = dim // 2
    batch = 8

    # Deterministic "parameter" init (mirrors torch.randn(half_dim)).
    weights = jax.random.normal(k_w, (half_dim,), dtype=jnp.float32)
    # Continuous timesteps in [0, 1), as in crowsonkb's v-diffusion (keeps
    # sin/cos args small so f32 range-reduction differences stay << 1e-5).
    x = jax.random.uniform(k_x, (batch,), dtype=jnp.float32)

    out = jax.block_until_ready(learned_sinusoidal_pos_emb(x, weights))
    ref = _reference(x, weights)
    assert out.shape == (batch, 1 + dim), out.shape
    assert jnp.allclose(out, ref, atol=1e-5, rtol=1e-5)

    # Batch not a multiple of 8: exercises pad + slice and a 2-step grid.
    x2 = jax.random.uniform(k_x2, (10,), dtype=jnp.float32)
    out2 = jax.block_until_ready(learned_sinusoidal_pos_emb(x2, weights))
    ref2 = _reference(x2, weights)
    assert out2.shape == (10, 1 + dim), out2.shape
    assert jnp.allclose(out2, ref2, atol=1e-5, rtol=1e-5)

    # Larger (still small) batch: multi-step pipelined grid + padding.
    x3 = jax.random.uniform(k_x3, (40,), dtype=jnp.float32)
    out3 = jax.block_until_ready(learned_sinusoidal_pos_emb(x3, weights))
    ref3 = _reference(x3, weights)
    assert out3.shape == (40, 1 + dim), out3.shape
    assert jnp.allclose(out3, ref3, atol=1e-5, rtol=1e-5)

    print("KERNEL_OK")
</pallas_src>

<mosaic_0001>
module attributes {stable_mosaic.version = 11 : i64} {
  func.func @_learned_sinusoidal_kernel(%arg0: i32, %arg1: memref<8x1xf32, #tpu.memory_space<vmem>>, %arg2: memref<1x33xf32, #tpu.memory_space<vmem>>, %arg3: memref<8x33xf32, #tpu.memory_space<vmem>>) attributes {dimension_semantics = [#tpu.dimension_semantics<parallel>], iteration_bounds = array<i64: 1>, scalar_prefetch = 0 : i64, scratch_operands = 0 : i64, tpu.core_type = #tpu.core_type<tc>, window_params = [{transform_indices = @transform_0, window_bounds = array<i64: 8, 1>}, {pipeline_mode = #tpu.pipeline_mode<synchronous>, transform_indices = @transform_1, window_bounds = array<i64: 1, 33>}, {transform_indices = @transform_2, window_bounds = array<i64: 8, 33>}]} {
    %c0 = arith.constant 0 : index
    %c0_0 = arith.constant 0 : index
    %0 = vector.load %arg1[%c0, %c0_0] : memref<8x1xf32, #tpu.memory_space<vmem>>, vector<8x1xf32>
    %c0_1 = arith.constant 0 : index
    %c0_2 = arith.constant 0 : index
    %1 = vector.load %arg2[%c0_1, %c0_2] : memref<1x33xf32, #tpu.memory_space<vmem>>, vector<1x33xf32>
    %cst = arith.constant 6.28318548 : f32
    %2 = vector.broadcast %cst : f32 to vector<1x33xf32>
    %3 = arith.mulf %1, %2 : vector<1x33xf32>
    %4 = vector.broadcast %0 : vector<8x1xf32> to vector<8x33xf32>
    %5 = vector.broadcast %3 : vector<1x33xf32> to vector<8x33xf32>
    %6 = arith.mulf %4, %5 : vector<8x33xf32>
    %7 = tpu.iota {dimensions = array<i32: 1>} : vector<8x33xi32>
    %c16_i32 = arith.constant 16 : i32
    %8 = vector.broadcast %c16_i32 : i32 to vector<8x33xi32>
    %9 = arith.cmpi sle, %7, %8 : vector<8x33xi32>
    %10 = math.sin %6 : vector<8x33xf32>
    %11 = math.cos %6 : vector<8x33xf32>
    %12 = arith.select %9, %10, %11 : vector<8x33xi1>, vector<8x33xf32>
    %c0_i32 = arith.constant 0 : i32
    %13 = vector.broadcast %c0_i32 : i32 to vector<8x33xi32>
    %14 = arith.cmpi eq, %7, %13 : vector<8x33xi32>
    %15 = vector.shape_cast %0 : vector<8x1xf32> to vector<8x1xf32>
    %16 = vector.broadcast %15 : vector<8x1xf32> to vector<8x33xf32>
    %17 = arith.select %14, %16, %12 : vector<8x33xi1>, vector<8x33xf32>
    %c0_3 = arith.constant 0 : index
    %c0_4 = arith.constant 0 : index
    %18 = vector.load %arg3[%c0_3, %c0_4] : memref<8x33xf32, #tpu.memory_space<vmem>>, vector<8x33xf32>
    tpu.vector_store %arg3[%c0_3, %c0_4], %17 {strides = array<i32>} : memref<8x33xf32, #tpu.memory_space<vmem>>, vector<8x33xf32>,
    return
  }
  func.func @transform_0(%arg0: i32) -> (i32, i32) {
    %c0_i32 = arith.constant 0 : i32
    %c0_i32_0 = arith.constant 0 : i32
    return %arg0, %c0_i32 : i32, i32
  }
  func.func @transform_1(%arg0: i32) -> (i32, i32) {
    %c0_i32 = arith.constant 0 : i32
    %c0_i32_0 = arith.constant 0 : i32
    %c0_i32_1 = arith.constant 0 : i32
    return %c0_i32, %c0_i32_0 : i32, i32
  }
  func.func @transform_2(%arg0: i32) -> (i32, i32) {
    %c0_i32 = arith.constant 0 : i32
    %c0_i32_0 = arith.constant 0 : i32
    return %arg0, %c0_i32 : i32, i32
  }
}

</mosaic_0001>

<llo_original>
// kernel: tpu_custom_call.1
$region0: #{tpu_custom_call.1}
  #allocation0 [shape = 'u32[]', space=smem, size = 0x4, offset = 0x4, fixed_abs, tag = 'smem constant byte address 0x4 - core index']
  #allocation1 [shape = 'u32[144,128]{1,0:T(1,128)}', space=vmem, size = 0x12000, scoped, tag = 'internal scratch']
  %s0 = inlined_call_operand.vmem [shape: f32[8,1], index: 0, kind: input, shape index: {}]
  %s1 = inlined_call_operand.vmem [shape: f32[1,33], index: 1, kind: input, shape index: {}]
  %s2 = inlined_call_operand.hbm [shape: f32[8,33], index: 2, kind: output, shape index: {}]
  %s3 = sld [smem:[#allocation0]]
  $region18: #{tpu_custom_call.1} parent=0
    _
  %s5 = ssub.s32 1, %s3
  %s6 = scalar_select 0, %s5, %s3
  $region1: #{tpu_custom_call.1} parent=0
    #allocation2 [shape = 'u8[4096]{0}', space=vmem, size = 0x1000, scoped, tag = 'output window, operand 0, single buffered']
    #allocation3 [shape = 's32[1]{0}', space=sflag, size = 0x4, scoped, tag = 'scoped memory for tpu_custom_call.1']
    %7 = vsyncpa [#allocation3], 0
    // Predicated region
    $region2: #{tpu_custom_call.1} parent=1 // pred_check
      _
    $region3: #{tpu_custom_call.1} parent=1 // pred_check_branch
      %9 = sbr.rel (0) target = $region5
    $region4: #{tpu_custom_call.1} parent=1 // pred_region
      _
    $region5: #{tpu_custom_call.1} parent=1 // pred_fallthru
      _
    // Predicated region
    $region6: #{tpu_custom_call.1} parent=1 // pred_check
      _
    $region7: #{tpu_custom_call.1} parent=1 // pred_check_branch
      %11 = sbr.rel (0) target = $region9
    $region8: #{tpu_custom_call.1} parent=1 // pred_region
      _
    $region9: #{tpu_custom_call.1} parent=1 // pred_fallthru
      _
    %v12 = vld [vmem:[%s0] sm:$0xff]
    %v13 = vld [vmem:[%s1] sm:$0x1]
    %v14 = vmul.f32 %v13, 6.2831855
    %16 = vset.pattern.permute.xlu0 0
    %17 = vperm.xlu0 %16, %v12
    %v18 = vpop.permute.xlu0 %17
    %v21 = vlaneseq
    %v22 = vshrl.u32 %v21, 7
    %v23 = vsub.s32 0, %v22
    %v24 = vrot.slane %v14, %v23
    %v26 = vmul.f32 %v18, %v24
    %v27 = vlaneseq
    %v28 = vand.u32 %v27, 127
    %vm29 = vcmp.le.s32.totalorder %v28, 16
    %v30 = vand.u32 2147483647, %v26
    %vm31 = vcmp.le.f32.partialorder %v30, 0.7853982
    %vm32 = vcmp.lt.s32.totalorder %v26, 0
    %v33 = vand.u32 %v26, 2139095040
    %v34 = vshrl.u32 %v33, 23
    %v35 = vsub.s32 %v34, 127
    %v36 = vand.u32 2147483647, %v26
    %v37 = vand.u32 %v36, 8388607
    %v38 = vor.u32 %v37, 8388608
    %v39 = vsub.s32 0, %v38
    %v40 = vadd.s32 %v35, 1
    %vm41 = vcmp.gt.s32.totalorder %v40, 0
    %v42 = vsel %vm41, %v40, 0
    %v43 = vshrl.u32 %v42, 5
    %v44 = vand.u32 %v42, 31
    %v45 = vsub.s32 32, %v44
    %v46 = vshrl.u32 683565275, %v45
    %v47 = vshll.u32 683565275, %v44
    %v48 = vshrl.u32 2475754826, %v45
    %v49 = vor.u32 %v47, %v48
    %v50 = vshll.u32 2475754826, %v44
    %v51 = vshrl.u32 2131351028, %v45
    %v52 = vor.u32 %v50, %v51
    %v53 = vshll.u32 2131351028, %v44
    %v54 = vshrl.u32 2102212464, %v45
    %v55 = vor.u32 %v53, %v54
    %v56 = vshll.u32 2102212464, %v44
    %v57 = vshrl.u32 920167782, %v45
    %v58 = vor.u32 %v56, %v57
    %v59 = vshll.u32 920167782, %v44
    %v60 = vshrl.u32 1326507024, %v45
    %v61 = vor.u32 %v59, %v60
    %vm62 = vcmp.lt.s32.totalorder %v43, 1
    %vm63 = vcmp.lt.s32.totalorder %v43, 2
    %vm64 = vcmp.lt.s32.totalorder %v43, 3
    %vm65 = vcmp.lt.s32.totalorder %v43, 4
    %v66 = vsel %vm62, %v46, %v49
    %v67 = vsel %vm65, %v55, 2102212464
    %v68 = vsel %vm64, %v52, %v67
    %v69 = vsel %vm63, %v66, %v68
    %v70 = vsel %vm62, %v49, %v52
    %v71 = vsel %vm65, %v58, 920167782
    %v72 = vsel %vm64, %v55, %v71
    %v73 = vsel %vm63, %v70, %v72
    %v74 = vsel %vm62, %v52, %v55
    %v75 = vsel %vm65, %v61, 1326507024
    %v76 = vsel %vm64, %v58, %v75
    %v77 = vsel %vm63, %v74, %v76
    %v78 = vshll.u32 %v38, 8
    %v79 = vmul.u32.u64.compose %v78, %v77
    %v80 = vextract.low.u32 %v79
    %v81 = vextract.high.u32 %v79
    %v82 = vmul.u32.u64.compose %v78, %v73
    %v83 = vextract.low.u32 %v82
    %v84 = vextract.high.u32 %v82
    %v85 = vmul.u32 %v78, %v69
    %v86 = vadd.s32 %v81, %v83
    %vm87 = vc.u32 %v81, %v83
    %v88 = vadd.s32 %v84, 1
    %v89 = vsel %vm87, %v88, %v84
    %v90 = vadd.s32 %v85, %v89
    %v91 = vadd.s32 %v90, 536870912
    %v92 = vshrl.u32 %v91, 30
    %v93 = vshll.u32 %v92, 30
    %v94 = vsub.s32 %v90, %v93
    %vm95 = vcmp.lt.s32.totalorder %v94, 0
    %v96 = vsub.s32 0, %v94
    %v97 = vsel %vm95, %v96, %v94
    %v98 = vclz %v97
    %v99 = vsub.s32 %v98, 2
    %vm100 = vcmp.gt.s32.totalorder 0, %v99
    %v101 = vsel %vm100, 0, %v99
    %v102 = vsub.s32 32, %v101
    %v103 = vshll.u32 %v94, %v101
    %v104 = vshrl.u32 %v86, %v102
    %v105 = vor.u32 %v103, %v104
    %v106 = vsub.s32 4294967266, %v101
    %v107 = vadd.s32 %v106, 127
    %v108 = vshll.u32 %v107, 23
    %v109 = vor.u32 4788187, %v108
    %v110 = vand.u32 2147483647, %v109
    %v112 = vcvt.s32.f32 %v105
    %v113 = vmul.f32 %v112, %v110
    %v114 = vxor.u32 %v113, 2147483648
    %v115 = vsel %vm32, %v114, %v113
    %v116 = vsub.s32 4, %v92
    %v117 = vsel %vm32, %v116, %v92
    %v118 = vsel %vm31, %v26, %v115
    %v119 = vsel %vm31, 0, %v117
    %v120 = vcosq.f32.pop %v118
    %v121 = vsinq.f32.pop %v118
    %vm122 = vweird.f32 %v26
    %v123 = vadd.s32 %v119, 3
    %v124 = vand.u32 %v123, 3
    %vm125 = vcmp.lt.s32.totalorder %v124, 2
    %vm126 = vcmp.eq.s32.totalorder %v124, 0
    %v127 = vxor.u32 %v121, 2147483648
    %v128 = vsel %vm126, %v120, %v127
    %vm129 = vcmp.eq.s32.totalorder %v124, 2
    %v130 = vxor.u32 %v120, 2147483648
    %v131 = vsel %vm129, %v130, %v121
    %v132 = vsel %vm125, %v128, %v131
    %v133 = vsel %vm122, nan, %v132
    %v134 = vand.u32 2147483647, %v26
    %vm135 = vcmp.le.f32.partialorder %v134, 0.7853982
    %vm136 = vcmp.lt.s32.totalorder %v26, 0
    %v137 = vand.u32 %v26, 2139095040
    %v138 = vshrl.u32 %v137, 23
    %v139 = vsub.s32 %v138, 127
    %v140 = vand.u32 2147483647, %v26
    %v141 = vand.u32 %v140, 8388607
    %v142 = vor.u32 %v141, 8388608
    %v143 = vsub.s32 0, %v142
    %v144 = vadd.s32 %v139, 1
    %vm145 = vcmp.gt.s32.totalorder %v144, 0
    %v146 = vsel %vm145, %v144, 0
    %v147 = vshrl.u32 %v146, 5
    %v148 = vand.u32 %v146, 31
    %v149 = vsub.s32 32, %v148
    %v150 = vshrl.u32 683565275, %v149
    %v151 = vshll.u32 683565275, %v148
    %v152 = vshrl.u32 2475754826, %v149
    %v153 = vor.u32 %v151, %v152
    %v154 = vshll.u32 2475754826, %v148
    %v155 = vshrl.u32 2131351028, %v149
    %v156 = vor.u32 %v154, %v155
    %v157 = vshll.u32 2131351028, %v148
    %v158 = vshrl.u32 2102212464, %v149
    %v159 = vor.u32 %v157, %v158
    %v160 = vshll.u32 2102212464, %v148
    %v161 = vshrl.u32 920167782, %v149
    %v162 = vor.u32 %v160, %v161
    %v163 = vshll.u32 920167782, %v148
    %v164 = vshrl.u32 1326507024, %v149
    %v165 = vor.u32 %v163, %v164
    %vm166 = vcmp.lt.s32.totalorder %v147, 1
    %vm167 = vcmp.lt.s32.totalorder %v147, 2
    %vm168 = vcmp.lt.s32.totalorder %v147, 3
    %vm169 = vcmp.lt.s32.totalorder %v147, 4
    %v170 = vsel %vm166, %v150, %v153
    %v171 = vsel %vm169, %v159, 2102212464
    %v172 = vsel %vm168, %v156, %v171
    %v173 = vsel %vm167, %v170, %v172
    %v174 = vsel %vm166, %v153, %v156
    %v175 = vsel %vm169, %v162, 920167782
    %v176 = vsel %vm168, %v159, %v175
    %v177 = vsel %vm167, %v174, %v176
    %v178 = vsel %vm166, %v156, %v159
    %v179 = vsel %vm169, %v165, 1326507024
    %v180 = vsel %vm168, %v162, %v179
    %v181 = vsel %vm167, %v178, %v180
    %v182 = vshll.u32 %v142, 8
    %v183 = vmul.u32.u64.compose %v182, %v181
    %v184 = vextract.low.u32 %v183
    %v185 = vextract.high.u32 %v183
    %v186 = vmul.u32.u64.compose %v182, %v177
    %v187 = vextract.low.u32 %v186
    %v188 = vextract.high.u32 %v186
    %v189 = vmul.u32 %v182, %v173
    %v190 = vadd.s32 %v185, %v187
    %vm191 = vc.u32 %v185, %v187
    %v192 = vadd.s32 %v188, 1
    %v193 = vsel %vm191, %v192, %v188
    %v194 = vadd.s32 %v189, %v193
    %v195 = vadd.s32 %v194, 536870912
    %v196 = vshrl.u32 %v195, 30
    %v197 = vshll.u32 %v196, 30
    %v198 = vsub.s32 %v194, %v197
    %vm199 = vcmp.lt.s32.totalorder %v198, 0
    %v200 = vsub.s32 0, %v198
    %v201 = vsel %vm199, %v200, %v198
    %v202 = vclz %v201
    %v203 = vsub.s32 %v202, 2
    %vm204 = vcmp.gt.s32.totalorder 0, %v203
    %v205 = vsel %vm204, 0, %v203
    %v206 = vsub.s32 32, %v205
    %v207 = vshll.u32 %v198, %v205
    %v208 = vshrl.u32 %v190, %v206
    %v209 = vor.u32 %v207, %v208
    %v210 = vsub.s32 4294967266, %v205
    %v211 = vadd.s32 %v210, 127
    %v212 = vshll.u32 %v211, 23
    %v213 = vor.u32 4788187, %v212
    %v214 = vand.u32 2147483647, %v213
    %v216 = vcvt.s32.f32 %v209
    %v217 = vmul.f32 %v216, %v214
    %v218 = vxor.u32 %v217, 2147483648
    %v219 = vsel %vm136, %v218, %v217
    %v220 = vsub.s32 4, %v196
    %v221 = vsel %vm136, %v220, %v196
    %v222 = vsel %vm135, %v26, %v219
    %v223 = vsel %vm135, 0, %v221
    %v224 = vcosq.f32.pop %v222
    %v225 = vsinq.f32.pop %v222
    %vm226 = vweird.f32 %v26
    %v227 = vand.u32 %v223, 3
    %vm228 = vcmp.lt.s32.totalorder %v227, 2
    %vm229 = vcmp.eq.s32.totalorder %v227, 0
    %v230 = vxor.u32 %v225, 2147483648
    %v231 = vsel %vm229, %v224, %v230
    %vm232 = vcmp.eq.s32.totalorder %v227, 2
    %v233 = vxor.u32 %v224, 2147483648
    %v234 = vsel %vm232, %v233, %v225
    %v235 = vsel %vm228, %v231, %v234
    %v236 = vsel %vm226, nan, %v235
    %v237 = vsel %vm29, %v133, %v236
    %vm238 = vcmp.eq.s32.totalorder %v28, 0
    %v239 = vsel %vm238, %v18, %v237
    %vm240 = vcmask 269312
    %241 = vst.msk [vmem:[#allocation2] sm:$0xff] %vm240, %v239
    // Predicated region
    $region10: #{tpu_custom_call.1} parent=1 // pred_check
      _
    $region11: #{tpu_custom_call.1} parent=1 // pred_check_branch
      %243 = sbr.rel (0) target = $region13
    $region12: #{tpu_custom_call.1} parent=1 // pred_region
      %s245 = ssub.s32 128, 128
      %246 = vsyncadd [#allocation3], %s245
      %s248 = sshll.u32 [#allocation2], 4
      %s249 = int_to_ptr.vmem [resolvable:$true] %s248
      %251 = dma.vmem_to_hbm [thread:$0]  %s249, 128, %s2, [#allocation3]
    $region13: #{tpu_custom_call.1} parent=1 // pred_fallthru
      _
    // Predicated region
    $region14: #{tpu_custom_call.1} parent=1 // pred_check
      _
    $region15: #{tpu_custom_call.1} parent=1 // pred_check_branch
      %253 = sbr.rel (0) target = $region17
    $region16: #{tpu_custom_call.1} parent=1 // pred_region
      %254 = dma.done [#allocation3], 128
    $region17: #{tpu_custom_call.1} parent=1 // pred_fallthru
      _
    %255 = vsyncpa [#allocation3], 1

</llo_original>
